<compile_context>
chip_gen: v7x
topology: tpu7x:2x2x1
jax: 0.10.0
libtpu: 0.0.40
codegen_flags: <defaults>
</compile_context>

<pallas_src>
import math

import jax
import jax.numpy as jnp
from jax.experimental import pallas as pl
from jax.experimental.pallas import tpu as pltpu

# ---------------- small, module-consistent sizes (real-model sizes in comments) -------------
IN_CHANNELS = 64      # in_channels / obj_dim        (4096)
MLP_DIM     = 128     # self.mlp_dim                 (2048)
EMBED_DIM   = 64      # self.embed_dim               (300)
HIDDEN_DIM  = 64      # CONTEXT_HIDDEN_DIM           (512)
POOLING_DIM = 128     # CONTEXT_POOLING_DIM          (4096)
NUM_OBJ_CLS = 16      # object classes               (151)
NUM_REL_CLS = 8       # relation classes             (51)
POS_DIM     = 128     # pos_embed output width (fixed 128 in the module)
LANE        = 128     # TPU lane width (pad narrow class outputs to this)
LN_EPS      = 1e-5
MAX_ROW_TILE = 128    # rows per grid step
# TODO(synk): at real model sizes (2048/4096 dims) the weight operands additionally need bf16
# storage + a K-tiled reduction grid axis with an f32 VMEM accumulator; at these toy sizes
# everything fits a single VMEM-resident block so f32 full-weight blocks are used.


# =============================== in-kernel building blocks =================================

def _relu(x):
    return jnp.maximum(x, 0.0)


def _dot(x, w):
    return jnp.dot(x, w, preferred_element_type=jnp.float32)


def _mlp2(x, w0, b0, w1, b1, pre_relu=False):
    """MLP(din, dh, dout, num_layers=2): l1(relu(l0(x))); optional leading relu (dropout=eval id)."""
    if pre_relu:
        x = _relu(x)
    return _dot(_relu(_dot(x, w0) + b0), w1) + b1


def _gate_fuse(a, v, w1, w2, b, sign):
    """gate = sigmoid(cat(a, v) @ Wg + bg), Wg row-split into [W1; W2];  a + sign * v * gate."""
    g = jax.nn.sigmoid(_dot(a, w1) + _dot(v, w2) + b)
    return a + sign * (v * g)


def _lin_res_ln(x, w, b, gamma, beta):
    """LayerNorm( relu(x @ W + b) + x ) * gamma + beta   (dropout = identity, eval)."""
    y = _relu(_dot(x, w) + b) + x
    mu = jnp.mean(y, axis=-1, keepdims=True)
    var = jnp.mean((y - mu) ** 2, axis=-1, keepdims=True)
    return (y - mu) * jax.lax.rsqrt(var + LN_EPS) * gamma + beta


# ===================================== Pallas kernels ======================================

def _entity_kernel(box_ref, logit_ref, roi_ref,
                   pw1_ref, pb1_ref, pw2_ref, pb2_ref,            # pos_embed (BN folded)
                   emb1_ref,                                      # obj_embed1 weight
                   wc_roi_ref, wc_emb_ref, wc_pos_ref, wc_b_ref,  # lin_obj_cyx split by concat blocks
                   oow_ref, oob_ref,                              # out_obj (padded to 128 lanes)
                   pew_ref, peb_ref,                              # post_emb
                   dists_ref, erep_ref):
    """Fused refine_obj_labels compute path + post_emb for one row tile."""
    # pos_embed: Linear(9,32)+BN(folded)  ->  Linear(32,128)+ReLU
    h = _dot(box_ref[...], pw1_ref[...]) + pb1_ref[...]
    pos = _relu(_dot(h, pw2_ref[...]) + pb2_ref[...])

    # obj_embed = softmax(predict_logits) @ obj_embed1.weight
    l = logit_ref[...]
    e = jnp.exp(l - jnp.max(l, axis=-1, keepdims=True))
    sm = e * pl.reciprocal(jnp.sum(e, axis=-1, keepdims=True), approx=True)
    obj_embed = _dot(sm, emb1_ref[...])

    # lin_obj_cyx(cat([roi, obj_embed, pos])) expressed as a sum of three block matmuls
    roi = roi_ref[...]
    pre = (_dot(roi, wc_roi_ref[...]) + _dot(obj_embed, wc_emb_ref[...])
           + _dot(pos, wc_pos_ref[...]) + wc_b_ref[...])

    dists_ref[...] = _dot(pre, oow_ref[...]) + oob_ref[...]        # lane-dense (padded) obj dists
    erep_ref[...] = _dot(roi, pew_ref[...]) + peb_ref[...]         # post_emb entity rep


def _relation_kernel(esub_ref, eobj_ref, vsub_ref, vobj_ref, u_ref,
                     wso0_ref, bso0_ref, wso1_ref, bso1_ref,       # stacked W_sub/W_obj MLPs [2,...]
                     v2s0w_ref, v2s0b_ref, v2s1w_ref, v2s1b_ref,   # vis2sem (shared weights)
                     gw1_ref, gw2_ref, gb_ref,                     # stacked gates [sub,obj,pred]
                     lw_ref, lb_ref, lng_ref, lnb_ref,             # stacked linear+LN [sub,obj,rel]
                     ds0w_ref, ds0b_ref, ds1w_ref, ds1b_ref,       # down_samp MLP
                     ph0w_ref, ph0b_ref, ph1w_ref, ph1b_ref,       # project_head MLP
                     proto_ref,                                    # pre-normed*scale, transposed, padded
                     out_ref):
    """Full per-pair relation chain for one row tile, everything kept in VMEM/vregs."""
    v2s = (v2s0w_ref[...], v2s0b_ref[...], v2s1w_ref[...], v2s1b_ref[...])

    s_embed = _mlp2(esub_ref[...], wso0_ref[0], bso0_ref[0], wso1_ref[0], bso1_ref[0])
    o_embed = _mlp2(eobj_ref[...], wso0_ref[1], bso0_ref[1], wso1_ref[1], bso1_ref[1])
    sem_sub = _mlp2(vsub_ref[...], *v2s)
    sem_obj = _mlp2(vobj_ref[...], *v2s)

    sub = _gate_fuse(s_embed, sem_sub, gw1_ref[0], gw2_ref[0], gb_ref[0], 1.0)
    obj = _gate_fuse(o_embed, sem_obj, gw1_ref[1], gw2_ref[1], gb_ref[1], 1.0)
    sub = _lin_res_ln(sub, lw_ref[0], lb_ref[0], lng_ref[0], lnb_ref[0])
    obj = _lin_res_ln(obj, lw_ref[1], lb_ref[1], lng_ref[1], lnb_ref[1])

    fusion_so = _relu(sub + obj) - (sub - obj) ** 2                 # fusion_func

    down = _mlp2(u_ref[...], ds0w_ref[...], ds0b_ref[...], ds1w_ref[...], ds1b_ref[...])
    sem_pred = _mlp2(down, *v2s)

    rel = _gate_fuse(fusion_so, sem_pred, gw1_ref[2], gw2_ref[2], gb_ref[2], -1.0)
    rel = _lin_res_ln(rel, lw_ref[2], lb_ref[2], lng_ref[2], lnb_ref[2])
    rel = _mlp2(rel, ph0w_ref[...], ph0b_ref[...], ph1w_ref[...], ph1b_ref[...], pre_relu=True)

    inv = jax.lax.rsqrt(jnp.sum(rel * rel, axis=-1, keepdims=True) + 1e-12)   # eps guards zero rows
    out_ref[...] = _dot(rel * inv, proto_ref[...])                  # lane-dense (padded) rel dists


def _proto_kernel(emb_ref, wp0_ref, bp0_ref, wp1_ref, bp1_ref,
                  ph0w_ref, ph0b_ref, ph1w_ref, ph1b_ref, scale_ref, out_ref):
    """Parameter-only predicate prototype branch: W_pred MLP -> project_head -> l2norm * scale."""
    proto = _mlp2(emb_ref[...], wp0_ref[...], bp0_ref[...], wp1_ref[...], bp1_ref[...])
    proto = _mlp2(proto, ph0w_ref[...], ph0b_ref[...], ph1w_ref[...], ph1b_ref[...], pre_relu=True)
    inv = jax.lax.rsqrt(jnp.sum(proto * proto, axis=-1, keepdims=True) + 1e-12)
    out_ref[...] = proto * inv * scale_ref[...]


# ================================= pallas_call plumbing ====================================

def _round_up(x, m):
    return (x + m - 1) // m * m


def _row_tile(n):
    return min(MAX_ROW_TILE, _round_up(n, 8))


def _pad_rows(x, n_pad):
    n = x.shape[0]
    if n == n_pad:
        return x
    return jnp.pad(x, [(0, n_pad - n)] + [(0, 0)] * (x.ndim - 1))


def _row_spec(tm, d):
    return pl.BlockSpec((tm, d), lambda i: (i, 0))


def _const_spec(shape):
    nd = len(shape)
    return pl.BlockSpec(shape, lambda i, _nd=nd: (0,) * _nd)


_PARALLEL_ROWS = pltpu.CompilerParams(dimension_semantics=("parallel",))


def entity_forward(p, box_info, obj_logits, roi_features):
    """Fused refine_obj_labels (minus argmax) + post_emb.  Returns (obj_dists, entity_rep)."""
    n = roi_features.shape[0]
    tm = _row_tile(n)
    n_pad = _round_up(n, tm)

    row_args = [_pad_rows(box_info, n_pad), _pad_rows(obj_logits, n_pad),
                _pad_rows(roi_features, n_pad)]
    const_args = [p["pos_w1"], p["pos_b1"], p["pos2_w"], p["pos2_b"],
                  p["obj_embed1_w"],
                  p["lin_cyx_roi_w"], p["lin_cyx_emb_w"], p["lin_cyx_pos_w"], p["lin_cyx_b"],
                  p["out_obj_w_pad"], p["out_obj_b_pad"],
                  p["post_emb_w"], p["post_emb_b"]]

    dists_pad, erep_pad = pl.pallas_call(
        _entity_kernel,
        out_shape=(jax.ShapeDtypeStruct((n_pad, LANE), jnp.float32),
                   jax.ShapeDtypeStruct((n_pad, 2 * MLP_DIM), jnp.float32)),
        grid=(n_pad // tm,),
        in_specs=[_row_spec(tm, a.shape[1]) for a in row_args]
                 + [_const_spec(a.shape) for a in const_args],
        out_specs=(_row_spec(tm, LANE), _row_spec(tm, 2 * MLP_DIM)),
        compiler_params=_PARALLEL_ROWS,
    )(*row_args, *const_args)

    return dists_pad[:n, :NUM_OBJ_CLS], erep_pad[:n]


def relation_forward(p, e_sub, e_obj, v_sub, v_obj, union_features):
    """Fused per-pair relation chain.  Returns rel_dists (R, NUM_REL_CLS)."""
    r = union_features.shape[0]
    tm = _row_tile(r)
    r_pad = _round_up(r, tm)

    row_args = [_pad_rows(e_sub, r_pad), _pad_rows(e_obj, r_pad),
                _pad_rows(v_sub, r_pad), _pad_rows(v_obj, r_pad),
                _pad_rows(union_features, r_pad)]
    const_args = [p["wso_l0_w"], p["wso_l0_b"], p["wso_l1_w"], p["wso_l1_b"],
                  p["vis2sem_l0_w"], p["vis2sem_l0_b"], p["vis2sem_l1_w"], p["vis2sem_l1_b"],
                  p["gate_w1"], p["gate_w2"], p["gate_b"],
                  p["lin_w"], p["lin_b"], p["ln_g"], p["ln_b"],
                  p["down_samp_l0_w"], p["down_samp_l0_b"], p["down_samp_l1_w"], p["down_samp_l1_b"],
                  p["project_head_l0_w"], p["project_head_l0_b"],
                  p["project_head_l1_w"], p["project_head_l1_b"],
                  p["proto_t"]]

    dists_pad = pl.pallas_call(
        _relation_kernel,
        out_shape=jax.ShapeDtypeStruct((r_pad, LANE), jnp.float32),
        grid=(r_pad // tm,),
        in_specs=[_row_spec(tm, a.shape[1]) for a in row_args]
                 + [_const_spec(a.shape) for a in const_args],
        out_specs=_row_spec(tm, LANE),
        compiler_params=_PARALLEL_ROWS,
    )(*row_args, *const_args)

    return dists_pad[:r, :NUM_REL_CLS]


def _predicate_prototypes(raw):
    """Parameter-only: returns pre-normalized, logit_scale-scaled, transposed, lane-padded protos."""
    args = [raw["rel_embed_w"],
            raw["W_pred_l0_w"], raw["W_pred_l0_b"], raw["W_pred_l1_w"], raw["W_pred_l1_b"],
            raw["project_head_l0_w"], raw["project_head_l0_b"],
            raw["project_head_l1_w"], raw["project_head_l1_b"],
            jnp.exp(raw["logit_scale"]).reshape(1, 1)]   # logit_scale.exp(), unclamped as in torch
    proto = pl.pallas_call(
        _proto_kernel,
        out_shape=jax.ShapeDtypeStruct((NUM_REL_CLS, 2 * MLP_DIM), jnp.float32),
        grid=(1,),
        in_specs=[_const_spec(a.shape) for a in args],
        out_specs=_const_spec((NUM_REL_CLS, 2 * MLP_DIM)),
    )(*args)
    # one-time transpose + lane padding (keeps the hot kernel's matmul lane-aligned, no in-kernel .T)
    return jnp.pad(proto.T, ((0, 0), (0, LANE - NUM_REL_CLS)))


# ==================================== parameters ===========================================

class _Init:
    def __init__(self, key):
        self.key = key

    def normal(self, shape, scale=0.02):
        self.key, sub = jax.random.split(self.key)
        return jax.random.normal(sub, shape, dtype=jnp.float32) * scale


def init_raw_params(key):
    g = _Init(key)
    p = {}

    def lin_p(name, din, dout):
        p[name + "_w"] = g.normal((din, dout))
        p[name + "_b"] = g.normal((1, dout), 0.01)

    def mlp_p(name, din, dh, dout):
        lin_p(name + "_l0", din, dh)
        lin_p(name + "_l1", dh, dout)

    lin_p("post_emb", IN_CHANNELS, 2 * MLP_DIM)
    p["obj_embed_w"]  = g.normal((NUM_OBJ_CLS, EMBED_DIM), 0.1)   # GloVe-init in the real model
    p["rel_embed_w"]  = g.normal((NUM_REL_CLS, EMBED_DIM), 0.1)
    p["obj_embed1_w"] = g.normal((NUM_OBJ_CLS, EMBED_DIM), 0.1)

    mlp_p("W_sub",  EMBED_DIM, MLP_DIM // 2, MLP_DIM)
    mlp_p("W_obj",  EMBED_DIM, MLP_DIM // 2, MLP_DIM)
    mlp_p("W_pred", EMBED_DIM, MLP_DIM // 2, MLP_DIM)

    # gate layers: Linear(2*mlp_dim, mlp_dim); weight row-split to match cat((*_embed, sem_*)) order
    for name in ("gate_sub", "gate_obj", "gate_pred"):
        p[name + "_w1"] = g.normal((MLP_DIM, MLP_DIM))
        p[name + "_w2"] = g.normal((MLP_DIM, MLP_DIM))
        p[name + "_b"]  = g.normal((1, MLP_DIM), 0.01)

    mlp_p("vis2sem",      MLP_DIM, 2 * MLP_DIM, MLP_DIM)
    mlp_p("project_head", MLP_DIM, MLP_DIM, 2 * MLP_DIM)
    mlp_p("down_samp",    POOLING_DIM, MLP_DIM, MLP_DIM)

    lin_p("linear_sub", MLP_DIM, MLP_DIM)
    lin_p("linear_obj", MLP_DIM, MLP_DIM)
    lin_p("linear_rel_rep", MLP_DIM, MLP_DIM)
    # self.linear_pred exists in __init__ but is unused in forward — not instantiated.

    for name in ("norm_sub", "norm_obj", "norm_rel_rep"):
        p[name + "_g"] = jnp.ones((1, MLP_DIM), jnp.float32)
        p[name + "_b"] = jnp.zeros((1, MLP_DIM), jnp.float32)

    p["logit_scale"] = jnp.asarray(math.log(1.0 / 0.07), jnp.float32)

    # pos_embed = Linear(9,32) -> BatchNorm1d(32) -> Linear(32,128) -> ReLU.
    # Eval-mode BN folded into Linear(9,32).
    # TODO(synk): with a real checkpoint fold the actual running stats / affine params here.
    w1 = g.normal((9, 32))
    b1 = g.normal((32,), 0.01)
    bn_gamma, bn_beta = jnp.ones((32,)), jnp.zeros((32,))
    bn_mean, bn_var = jnp.zeros((32,)), jnp.ones((32,))
    s = bn_gamma / jnp.sqrt(bn_var + 1e-5)
    p["pos_w1"] = w1 * s[None, :]
    p["pos_b1"] = ((b1 - bn_mean) * s + bn_beta)[None, :]
    lin_p("pos2", 32, POS_DIM)

    lin_p("lin_obj_cyx", IN_CHANNELS + EMBED_DIM + POS_DIM, HIDDEN_DIM)
    lin_p("out_obj", HIDDEN_DIM, NUM_OBJ_CLS)
    return p


def prepare_params(raw):
    """One-time parameter packing: split/stack/pad weights for the fused kernels and hoist the
    predicate-prototype branch (parameter-only) out of the per-step forward."""
    p = dict(raw)

    # lin_obj_cyx weight split along Din to match cat([roi, obj_embed, pos_embed], -1)
    w = raw["lin_obj_cyx_w"]
    p["lin_cyx_roi_w"] = w[:IN_CHANNELS]
    p["lin_cyx_emb_w"] = w[IN_CHANNELS:IN_CHANNELS + EMBED_DIM]
    p["lin_cyx_pos_w"] = w[IN_CHANNELS + EMBED_DIM:]
    p["lin_cyx_b"] = raw["lin_obj_cyx_b"]

    # lane-dense padded out_obj head (slice back to NUM_OBJ_CLS in the wrapper)
    p["out_obj_w_pad"] = jnp.pad(raw["out_obj_w"], ((0, 0), (0, LANE - NUM_OBJ_CLS)))
    p["out_obj_b_pad"] = jnp.pad(raw["out_obj_b"], ((0, 0), (0, LANE - NUM_OBJ_CLS)))

    # stacked W_sub / W_obj MLPs (indexed 0=sub, 1=obj inside the kernel)
    p["wso_l0_w"] = jnp.stack([raw["W_sub_l0_w"], raw["W_obj_l0_w"]])
    p["wso_l0_b"] = jnp.stack([raw["W_sub_l0_b"], raw["W_obj_l0_b"]])
    p["wso_l1_w"] = jnp.stack([raw["W_sub_l1_w"], raw["W_obj_l1_w"]])
    p["wso_l1_b"] = jnp.stack([raw["W_sub_l1_b"], raw["W_obj_l1_b"]])

    # stacked gates (0=sub, 1=obj, 2=pred)
    p["gate_w1"] = jnp.stack([raw["gate_sub_w1"], raw["gate_obj_w1"], raw["gate_pred_w1"]])
    p["gate_w2"] = jnp.stack([raw["gate_sub_w2"], raw["gate_obj_w2"], raw["gate_pred_w2"]])
    p["gate_b"]  = jnp.stack([raw["gate_sub_b"], raw["gate_obj_b"], raw["gate_pred_b"]])

    # stacked linear + LayerNorm (0=sub, 1=obj, 2=rel_rep)
    p["lin_w"] = jnp.stack([raw["linear_sub_w"], raw["linear_obj_w"], raw["linear_rel_rep_w"]])
    p["lin_b"] = jnp.stack([raw["linear_sub_b"], raw["linear_obj_b"], raw["linear_rel_rep_b"]])
    p["ln_g"]  = jnp.stack([raw["norm_sub_g"], raw["norm_obj_g"], raw["norm_rel_rep_g"]])
    p["ln_b"]  = jnp.stack([raw["norm_sub_b"], raw["norm_obj_b"], raw["norm_rel_rep_b"]])

    # pre-normalized, scaled, transposed, lane-padded predicate prototypes
    p["proto_t"] = _predicate_prototypes(raw)
    return p


# ====================================== glue ===============================================

def encode_box_info(proposals):
    """9-d normalized box geometry per proposal (same formula as maskrcnn_benchmark)."""
    infos = []
    for prop in proposals:
        boxes = prop["boxes"]                       # (n, 4) xyxy
        wid, hei = prop["size"]
        wh = boxes[:, 2:4] - boxes[:, 0:2] + 1.0
        xy = boxes[:, 0:2] + 0.5 * wh
        w, h = wh[:, 0:1], wh[:, 1:2]
        x, y = xy[:, 0:1], xy[:, 1:2]
        x1, y1, x2, y2 = boxes[:, 0:1], boxes[:, 1:2], boxes[:, 2:3], boxes[:, 3:4]
        info = jnp.concatenate(
            [w / wid, h / hei, x / wid, y / hei, x1 / wid, y1 / hei, x2 / wid, y2 / hei,
             w * h / (wid * hei)], axis=-1)
        infos.append(info)
    return jnp.concatenate(infos, axis=0)


def pen_forward(p, proposals, rel_pair_idxs, roi_features, union_features):
    num_objs = [int(pr["boxes"].shape[0]) for pr in proposals]
    num_rels = [int(r.shape[0]) for r in rel_pair_idxs]

    # -------- entity path (refine_obj_labels + post_emb), one fused kernel --------
    box_info = encode_box_info(proposals)
    obj_logits = jnp.concatenate([pr["predict_logits"] for pr in proposals], axis=0)
    entity_dists, entity_rep = entity_forward(p, box_info, obj_logits, roi_features)
    entity_preds = (jnp.argmax(entity_dists[:, 1:], axis=1) + 1).astype(jnp.int32)

    n = roi_features.shape[0]
    entity_rep = entity_rep.reshape(n, 2, MLP_DIM)
    sub_rep = entity_rep[:, 1, :]            # matches torch: sub = entity_rep[:, 1]
    obj_rep = entity_rep[:, 0, :]            #               obj = entity_rep[:, 0]
    entity_embeds = jnp.take(p["obj_embed_w"], entity_preds, axis=0)

    # -------- flatten the per-image pair loop with global row indices --------
    offsets, acc = [], 0
    for no in num_objs:
        offsets.append(acc)
        acc += no
    sub_idx = jnp.concatenate([r[:, 0] + off for r, off in zip(rel_pair_idxs, offsets)], axis=0)
    obj_idx = jnp.concatenate([r[:, 1] + off for r, off in zip(rel_pair_idxs, offsets)], axis=0)

    # -------- relation path, one fused kernel --------
    rel_dists = relation_forward(
        p,
        jnp.take(entity_embeds, sub_idx, axis=0),
        jnp.take(entity_embeds, obj_idx, axis=0),
        jnp.take(sub_rep, sub_idx, axis=0),
        jnp.take(obj_rep, obj_idx, axis=0),
        union_features)

    pair_pred = jnp.stack([jnp.take(entity_preds, sub_idx), jnp.take(entity_preds, obj_idx)], axis=1)

    # split per image (matches .split(num_objs)/.split(num_rels))
    ed_split, rd_split = [], []
    o = 0
    for no in num_objs:
        ed_split.append(entity_dists[o:o + no]); o += no
    r = 0
    for nr in num_rels:
        rd_split.append(rel_dists[r:r + nr]); r += nr

    add_losses = {}   # TODO(synk): training-only prototype regularisation losses (l21 / dist / triplet) not implemented (eval path).
    add_data = {"pair_pred": pair_pred}
    return ed_split, rd_split, add_losses, add_data


# ====================================== main ===============================================

if __name__ == "__main__":
    key = jax.random.PRNGKey(0)
    k_param, k_box, k_logit, k_roi, k_union, k_pair = jax.random.split(key, 6)

    raw_params = init_raw_params(k_param)
    params = prepare_params(raw_params)     # includes the one-time prototype kernel

    num_objs = [4, 5]
    num_rels = [6, 4]
    img_size = (100.0, 80.0)   # (width, height)

    proposals = []
    kb, kl = k_box, k_logit
    for no in num_objs:
        kb, s1, s2 = jax.random.split(kb, 3)
        x1y1 = jax.random.uniform(s1, (no, 2), minval=0.0, maxval=50.0)
        wh = jax.random.uniform(s2, (no, 2), minval=5.0, maxval=30.0)
        boxes = jnp.concatenate([x1y1, x1y1 + wh], axis=-1).astype(jnp.float32)
        kl, sl = jax.random.split(kl)
        logits = jax.random.normal(sl, (no, NUM_OBJ_CLS), dtype=jnp.float32)
        proposals.append({"boxes": boxes, "size": img_size, "predict_logits": logits})

    rel_pair_idxs = []
    kp = k_pair
    for no, nr in zip(num_objs, num_rels):
        kp, sp = jax.random.split(kp)
        rel_pair_idxs.append(jax.random.randint(sp, (nr, 2), 0, no, dtype=jnp.int32))

    n_total = sum(num_objs)
    r_total = sum(num_rels)
    roi_features = jax.random.normal(k_roi, (n_total, IN_CHANNELS), dtype=jnp.float32)
    union_features = jax.random.normal(k_union, (r_total, POOLING_DIM), dtype=jnp.float32)

    entity_dists, rel_dists, add_losses, add_data = pen_forward(
        params, proposals, rel_pair_idxs, roi_features, union_features)

    jax.block_until_ready((entity_dists, rel_dists, add_data))

    assert len(entity_dists) == 2 and len(rel_dists) == 2
    assert entity_dists[0].shape == (num_objs[0], NUM_OBJ_CLS)
    assert entity_dists[1].shape == (num_objs[1], NUM_OBJ_CLS)
    assert rel_dists[0].shape == (num_rels[0], NUM_REL_CLS)
    assert rel_dists[1].shape == (num_rels[1], NUM_REL_CLS)
    assert add_data["pair_pred"].shape == (r_total, 2)
    assert bool(jnp.all(jnp.isfinite(rel_dists[0]))) and bool(jnp.all(jnp.isfinite(entity_dists[0])))
    print("KERNEL_OK")
</pallas_src>

<mosaic_0001>
module attributes {stable_mosaic.version = 11 : i64} {
  func.func @_proto_kernel(%arg0: i32, %arg1: memref<8x64xf32, #tpu.memory_space<vmem>>, %arg2: memref<64x64xf32, #tpu.memory_space<vmem>>, %arg3: memref<1x64xf32, #tpu.memory_space<vmem>>, %arg4: memref<64x128xf32, #tpu.memory_space<vmem>>, %arg5: memref<1x128xf32, #tpu.memory_space<vmem>>, %arg6: memref<128x128xf32, #tpu.memory_space<vmem>>, %arg7: memref<1x128xf32, #tpu.memory_space<vmem>>, %arg8: memref<128x256xf32, #tpu.memory_space<vmem>>, %arg9: memref<1x256xf32, #tpu.memory_space<vmem>>, %arg10: memref<1x1xf32, #tpu.memory_space<vmem>>, %arg11: memref<8x256xf32, #tpu.memory_space<vmem>>) attributes {dimension_semantics = [#tpu.dimension_semantics<arbitrary>], iteration_bounds = array<i64: 1>, scalar_prefetch = 0 : i64, scratch_operands = 0 : i64, tpu.core_type = #tpu.core_type<tc>, window_params = [{pipeline_mode = #tpu.pipeline_mode<synchronous>, transform_indices = @transform_0, window_bounds = array<i64: 8, 64>}, {pipeline_mode = #tpu.pipeline_mode<synchronous>, transform_indices = @transform_1, window_bounds = array<i64: 64, 64>}, {pipeline_mode = #tpu.pipeline_mode<synchronous>, transform_indices = @transform_2, window_bounds = array<i64: 1, 64>}, {pipeline_mode = #tpu.pipeline_mode<synchronous>, transform_indices = @transform_3, window_bounds = array<i64: 64, 128>}, {pipeline_mode = #tpu.pipeline_mode<synchronous>, transform_indices = @transform_4, window_bounds = array<i64: 1, 128>}, {pipeline_mode = #tpu.pipeline_mode<synchronous>, transform_indices = @transform_5, window_bounds = array<i64: 128, 128>}, {pipeline_mode = #tpu.pipeline_mode<synchronous>, transform_indices = @transform_6, window_bounds = array<i64: 1, 128>}, {pipeline_mode = #tpu.pipeline_mode<synchronous>, transform_indices = @transform_7, window_bounds = array<i64: 128, 256>}, {pipeline_mode = #tpu.pipeline_mode<synchronous>, transform_indices = @transform_8, window_bounds = array<i64: 1, 256>}, {pipeline_mode = #tpu.pipeline_mode<synchronous>, transform_indices = @transform_9, window_bounds = array<i64: 1, 1>}, {pipeline_mode = #tpu.pipeline_mode<synchronous>, transform_indices = @transform_10, window_bounds = array<i64: 8, 256>}]} {
    %c0 = arith.constant 0 : index
    %c0_0 = arith.constant 0 : index
    %0 = vector.load %arg1[%c0, %c0_0] : memref<8x64xf32, #tpu.memory_space<vmem>>, vector<8x64xf32>
    %c0_1 = arith.constant 0 : index
    %c0_2 = arith.constant 0 : index
    %1 = vector.load %arg2[%c0_1, %c0_2] : memref<64x64xf32, #tpu.memory_space<vmem>>, vector<64x64xf32>
    %c0_3 = arith.constant 0 : index
    %c0_4 = arith.constant 0 : index
    %2 = vector.load %arg3[%c0_3, %c0_4] : memref<1x64xf32, #tpu.memory_space<vmem>>, vector<1x64xf32>
    %c0_5 = arith.constant 0 : index
    %c0_6 = arith.constant 0 : index
    %3 = vector.load %arg4[%c0_5, %c0_6] : memref<64x128xf32, #tpu.memory_space<vmem>>, vector<64x128xf32>
    %c0_7 = arith.constant 0 : index
    %c0_8 = arith.constant 0 : index
    %4 = vector.load %arg5[%c0_7, %c0_8] : memref<1x128xf32, #tpu.memory_space<vmem>>, vector<1x128xf32>
    %cst = arith.constant dense<0.000000e+00> : vector<8x64xf32>
    %5 = tpu.matmul %0, %1, %cst {dimension_numbers = #tpu.dot_dimension_numbers<[1], [0], [0], [1], [0, 0, 1, 1], [], []>} : vector<8x64xf32>, vector<64x64xf32>, vector<8x64xf32> -> vector<8x64xf32>
    %6 = vector.broadcast %2 : vector<1x64xf32> to vector<8x64xf32>
    %7 = arith.addf %5, %6 : vector<8x64xf32>
    %cst_9 = arith.constant 0.000000e+00 : f32
    %8 = vector.broadcast %cst_9 : f32 to vector<8x64xf32>
    %9 = arith.maximumf %7, %8 : vector<8x64xf32>
    %cst_10 = arith.constant dense<0.000000e+00> : vector<8x128xf32>
    %10 = tpu.matmul %9, %3, %cst_10 {dimension_numbers = #tpu.dot_dimension_numbers<[1], [0], [0], [1], [0, 0, 1, 1], [], []>} : vector<8x64xf32>, vector<64x128xf32>, vector<8x128xf32> -> vector<8x128xf32>
    %11 = vector.broadcast %4 : vector<1x128xf32> to vector<8x128xf32>
    %12 = arith.addf %10, %11 : vector<8x128xf32>
    %c0_11 = arith.constant 0 : index
    %c0_12 = arith.constant 0 : index
    %13 = vector.load %arg6[%c0_11, %c0_12] : memref<128x128xf32, #tpu.memory_space<vmem>>, vector<128x128xf32>
    %c0_13 = arith.constant 0 : index
    %c0_14 = arith.constant 0 : index
    %14 = vector.load %arg7[%c0_13, %c0_14] : memref<1x128xf32, #tpu.memory_space<vmem>>, vector<1x128xf32>
    %c0_15 = arith.constant 0 : index
    %c0_16 = arith.constant 0 : index
    %15 = vector.load %arg8[%c0_15, %c0_16] : memref<128x256xf32, #tpu.memory_space<vmem>>, vector<128x256xf32>
    %c0_17 = arith.constant 0 : index
    %c0_18 = arith.constant 0 : index
    %16 = vector.load %arg9[%c0_17, %c0_18] : memref<1x256xf32, #tpu.memory_space<vmem>>, vector<1x256xf32>
    %cst_19 = arith.constant 0.000000e+00 : f32
    %17 = vector.broadcast %cst_19 : f32 to vector<8x128xf32>
    %18 = arith.maximumf %12, %17 : vector<8x128xf32>
    %cst_20 = arith.constant dense<0.000000e+00> : vector<8x128xf32>
    %19 = tpu.matmul %18, %13, %cst_20 {dimension_numbers = #tpu.dot_dimension_numbers<[1], [0], [0], [1], [0, 0, 1, 1], [], []>} : vector<8x128xf32>, vector<128x128xf32>, vector<8x128xf32> -> vector<8x128xf32>
    %20 = vector.broadcast %14 : vector<1x128xf32> to vector<8x128xf32>
    %21 = arith.addf %19, %20 : vector<8x128xf32>
    %cst_21 = arith.constant 0.000000e+00 : f32
    %22 = vector.broadcast %cst_21 : f32 to vector<8x128xf32>
    %23 = arith.maximumf %21, %22 : vector<8x128xf32>
    %cst_22 = arith.constant dense<0.000000e+00> : vector<8x256xf32>
    %24 = tpu.matmul %23, %15, %cst_22 {dimension_numbers = #tpu.dot_dimension_numbers<[1], [0], [0], [1], [0, 0, 1, 1], [], []>} : vector<8x128xf32>, vector<128x256xf32>, vector<8x256xf32> -> vector<8x256xf32>
    %25 = vector.broadcast %16 : vector<1x256xf32> to vector<8x256xf32>
    %26 = arith.addf %24, %25 : vector<8x256xf32>
    %27 = arith.mulf %26, %26 : vector<8x256xf32>
    %cst_23 = arith.constant dense<0.000000e+00> : vector<8xf32>
    %28 = vector.multi_reduction <add>, %27, %cst_23 [1] : vector<8x256xf32> to vector<8xf32>
    %29 = vector.shape_cast %28 : vector<8xf32> to vector<8x1xf32>
    %cst_24 = arith.constant 9.99999996E-13 : f32
    %30 = vector.broadcast %cst_24 : f32 to vector<8x1xf32>
    %31 = arith.addf %29, %30 : vector<8x1xf32>
    %32 = math.rsqrt %31 : vector<8x1xf32>
    %33 = vector.broadcast %32 : vector<8x1xf32> to vector<8x256xf32>
    %34 = arith.mulf %26, %33 : vector<8x256xf32>
    %c0_25 = arith.constant 0 : index
    %c0_26 = arith.constant 0 : index
    %35 = vector.load %arg10[%c0_25, %c0_26] : memref<1x1xf32, #tpu.memory_space<vmem>>, vector<1x1xf32>
    %36 = vector.broadcast %35 : vector<1x1xf32> to vector<8x256xf32>
    %37 = arith.mulf %34, %36 : vector<8x256xf32>
    %c0_27 = arith.constant 0 : index
    %c0_28 = arith.constant 0 : index
    %38 = vector.load %arg11[%c0_27, %c0_28] : memref<8x256xf32, #tpu.memory_space<vmem>>, vector<8x256xf32>
    tpu.vector_store %arg11[%c0_27, %c0_28], %37 {strides = array<i32>} : memref<8x256xf32, #tpu.memory_space<vmem>>, vector<8x256xf32>,
    return
  }
  func.func @transform_0(%arg0: i32) -> (i32, i32) {
    %c0_i32 = arith.constant 0 : i32
    %c0_i32_0 = arith.constant 0 : i32
    %c0_i32_1 = arith.constant 0 : i32
    return %c0_i32, %c0_i32_0 : i32, i32
  }
  func.func @transform_1(%arg0: i32) -> (i32, i32) {
    %c0_i32 = arith.constant 0 : i32
    %c0_i32_0 = arith.constant 0 : i32
    %c0_i32_1 = arith.constant 0 : i32
    return %c0_i32, %c0_i32_0 : i32, i32
  }
  func.func @transform_2(%arg0: i32) -> (i32, i32) {
    %c0_i32 = arith.constant 0 : i32
    %c0_i32_0 = arith.constant 0 : i32
    %c0_i32_1 = arith.constant 0 : i32
    return %c0_i32, %c0_i32_0 : i32, i32
  }
  func.func @transform_3(%arg0: i32) -> (i32, i32) {
    %c0_i32 = arith.constant 0 : i32
    %c0_i32_0 = arith.constant 0 : i32
    %c0_i32_1 = arith.constant 0 : i32
    return %c0_i32, %c0_i32_0 : i32, i32
  }
  func.func @transform_4(%arg0: i32) -> (i32, i32) {
    %c0_i32 = arith.constant 0 : i32
    %c0_i32_0 = arith.constant 0 : i32
    %c0_i32_1 = arith.constant 0 : i32
    return %c0_i32, %c0_i32_0 : i32, i32
  }
  func.func @transform_5(%arg0: i32) -> (i32, i32) {
    %c0_i32 = arith.constant 0 : i32
    %c0_i32_0 = arith.constant 0 : i32
    %c0_i32_1 = arith.constant 0 : i32
    return %c0_i32, %c0_i32_0 : i32, i32
  }
  func.func @transform_6(%arg0: i32) -> (i32, i32) {
    %c0_i32 = arith.constant 0 : i32
    %c0_i32_0 = arith.constant 0 : i32
    %c0_i32_1 = arith.constant 0 : i32
    return %c0_i32, %c0_i32_0 : i32, i32
  }
  func.func @transform_7(%arg0: i32) -> (i32, i32) {
    %c0_i32 = arith.constant 0 : i32
    %c0_i32_0 = arith.constant 0 : i32
    %c0_i32_1 = arith.constant 0 : i32
    return %c0_i32, %c0_i32_0 : i32, i32
  }
  func.func @transform_8(%arg0: i32) -> (i32, i32) {
    %c0_i32 = arith.constant 0 : i32
    %c0_i32_0 = arith.constant 0 : i32
    %c0_i32_1 = arith.constant 0 : i32
    return %c0_i32, %c0_i32_0 : i32, i32
  }
  func.func @transform_9(%arg0: i32) -> (i32, i32) {
    %c0_i32 = arith.constant 0 : i32
    %c0_i32_0 = arith.constant 0 : i32
    %c0_i32_1 = arith.constant 0 : i32
    return %c0_i32, %c0_i32_0 : i32, i32
  }
  func.func @transform_10(%arg0: i32) -> (i32, i32) {
    %c0_i32 = arith.constant 0 : i32
    %c0_i32_0 = arith.constant 0 : i32
    %c0_i32_1 = arith.constant 0 : i32
    return %c0_i32, %c0_i32_0 : i32, i32
  }
}

</mosaic_0001>

<llo_original>
// kernel: tpu_custom_call.1
$region0: #{tpu_custom_call.1}
  #allocation0 [shape = 'u32[]', space=smem, size = 0x4, offset = 0x4, fixed_abs, tag = 'smem constant byte address 0x4 - core index']
  #allocation1 [shape = 'u32[144,128]{1,0:T(1,128)}', space=vmem, size = 0x12000, scoped, tag = 'internal scratch']
  #allocation2 [shape = 'f32[1,1]{1,0:T(1,128)S(1)}', space=vmem, size = 0x200, scoped, tag = 'scoped memory for tpu_custom_call.1']
  %s0 = inlined_call_operand.hbm [shape: f32[8,64], index: 0, kind: input, shape index: {}]
  %s1 = inlined_call_operand.hbm [shape: f32[64,64], index: 1, kind: input, shape index: {}]
  %s2 = inlined_call_operand.vmem [shape: f32[1,64], index: 2, kind: input, shape index: {}]
  %s3 = inlined_call_operand.hbm [shape: f32[64,128], index: 3, kind: input, shape index: {}]
  %s4 = inlined_call_operand.vmem [shape: f32[1,128], index: 4, kind: input, shape index: {}]
  %s5 = inlined_call_operand.hbm [shape: f32[128,128], index: 5, kind: input, shape index: {}]
  %s6 = inlined_call_operand.vmem [shape: f32[1,128], index: 6, kind: input, shape index: {}]
  %s7 = inlined_call_operand.hbm [shape: f32[128,256], index: 7, kind: input, shape index: {}]
  %s8 = inlined_call_operand.vmem [shape: f32[1,256], index: 8, kind: input, shape index: {}]
  %s9 = inlined_call_operand.<no memory space> [shape: f32[1,1], index: 9, kind: input, shape index: {}]
  %s10 = inlined_call_operand.hbm [shape: f32[8,256], index: 10, kind: output, shape index: {}]
  %s11 = sld [smem:[#allocation0]]
  $region70: #{tpu_custom_call.1} parent=0
    _
  %s13 = ssub.s32 1, %s11
  %s14 = scalar_select 0, %s13, %s11
  %v15 = vstv %s9
  %16 = vst [vmem:[#allocation2] sm:$0x1] %v15
  $region1: #{tpu_custom_call.1} parent=0
    #allocation3 [shape = 'u8[4096]{0}', space=vmem, size = 0x1000, scoped, tag = 'input window, operand 0, single buffered']
    #allocation4 [shape = 's32[1]{0}', space=sflag, size = 0x4, scoped, tag = 'scoped memory for tpu_custom_call.1']
    #allocation5 [shape = 's32[1]{0}', space=sflag, size = 0x4, scoped, tag = 'scoped memory for tpu_custom_call.1']
    #allocation6 [shape = 'u8[32768]{0}', space=vmem, size = 0x8000, scoped, tag = 'input window, operand 1, single buffered']
    #allocation7 [shape = 's32[1]{0}', space=sflag, size = 0x4, scoped, tag = 'scoped memory for tpu_custom_call.1']
    #allocation8 [shape = 'u8[32768]{0}', space=vmem, size = 0x8000, scoped, tag = 'input window, operand 3, single buffered']
    #allocation9 [shape = 'u8[65536]{0}', space=vmem, size = 0x10000, scoped, tag = 'input window, operand 5, single buffered']
    #allocation10 [shape = 's32[1]{0}', space=sflag, size = 0x4, scoped, tag = 'scoped memory for tpu_custom_call.1']
    #allocation11 [shape = 'u8[131072]{0}', space=vmem, size = 0x20000, scoped, tag = 'input window, operand 7, single buffered']
    #allocation12 [shape = 'u8[8192]{0}', space=vmem, size = 0x2000, scoped, tag = 'output window, operand 0, single buffered']
    %17 = vsyncpa [#allocation4], 0
    %18 = vsyncpa [#allocation7], 0
    %19 = vsyncpa [#allocation10], 0
    %20 = vsyncpa [#allocation5], 0
    // Predicated region
    $region2: #{tpu_custom_call.1} parent=1 // pred_check
      _
    $region3: #{tpu_custom_call.1} parent=1 // pred_check_branch
      %22 = sbr.rel (0) target = $region5
    $region4: #{tpu_custom_call.1} parent=1 // pred_region
      %s24 = ssub.s32 128, 128
      %25 = vsyncadd [#allocation4], %s24
      %s27 = sshll.u32 [#allocation3], 4
      %s28 = int_to_ptr.vmem [resolvable:$true] %s27
      %30 = dma.hbm_to_vmem [thread:$0]  %s0, 128, %s28, [#allocation4]
    $region5: #{tpu_custom_call.1} parent=1 // pred_fallthru
      _
    // Predicated region
    $region6: #{tpu_custom_call.1} parent=1 // pred_check
      _
    $region7: #{tpu_custom_call.1} parent=1 // pred_check_branch
      %32 = sbr.rel (0) target = $region9
    $region8: #{tpu_custom_call.1} parent=1 // pred_region
      %s34 = ssub.s32 1024, 1024
      %35 = vsyncadd [#allocation7], %s34
      %s36 = sshll.u32 [#allocation6], 4
      %s37 = int_to_ptr.vmem [resolvable:$true] %s36
      %42 = dma.hbm_to_vmem [thread:$0]  %s1, 1024, %s37, [#allocation7], 128, 128, 8
    $region9: #{tpu_custom_call.1} parent=1 // pred_fallthru
      _
    // Predicated region
    $region10: #{tpu_custom_call.1} parent=1 // pred_check
      _
    $region11: #{tpu_custom_call.1} parent=1 // pred_check_branch
      %44 = sbr.rel (0) target = $region13
    $region12: #{tpu_custom_call.1} parent=1 // pred_region
      _
    $region13: #{tpu_custom_call.1} parent=1 // pred_fallthru
      _
    // Predicated region
    $region14: #{tpu_custom_call.1} parent=1 // pred_check
      _
    $region15: #{tpu_custom_call.1} parent=1 // pred_check_branch
      %46 = sbr.rel (0) target = $region17
    $region16: #{tpu_custom_call.1} parent=1 // pred_region
      %s48 = ssub.s32 1024, 1024
      %49 = vsyncadd [#allocation7], %s48
      %s50 = sshll.u32 [#allocation8], 4
      %s51 = int_to_ptr.vmem [resolvable:$true] %s50
      %56 = dma.hbm_to_vmem [thread:$0]  %s3, 1024, %s51, [#allocation7], 128, 128, 8
    $region17: #{tpu_custom_call.1} parent=1 // pred_fallthru
      _
    // Predicated region
    $region18: #{tpu_custom_call.1} parent=1 // pred_check
      _
    $region19: #{tpu_custom_call.1} parent=1 // pred_check_branch
      %58 = sbr.rel (0) target = $region21
    $region20: #{tpu_custom_call.1} parent=1 // pred_region
      _
    $region21: #{tpu_custom_call.1} parent=1 // pred_fallthru
      _
    // Predicated region
    $region22: #{tpu_custom_call.1} parent=1 // pred_check
      _
    $region23: #{tpu_custom_call.1} parent=1 // pred_check_branch
      %60 = sbr.rel (0) target = $region25
    $region24: #{tpu_custom_call.1} parent=1 // pred_region
      %s62 = ssub.s32 2048, 2048
      %63 = vsyncadd [#allocation10], %s62
      %s64 = sshll.u32 [#allocation9], 4
      %s65 = int_to_ptr.vmem [resolvable:$true] %s64
      %70 = dma.hbm_to_vmem [thread:$0]  %s5, 2048, %s65, [#allocation10], 128, 128, 8
    $region25: #{tpu_custom_call.1} parent=1 // pred_fallthru
      _
    // Predicated region
    $region26: #{tpu_custom_call.1} parent=1 // pred_check
      _
    $region27: #{tpu_custom_call.1} parent=1 // pred_check_branch
      %72 = sbr.rel (0) target = $region29
    $region28: #{tpu_custom_call.1} parent=1 // pred_region
      _
    $region29: #{tpu_custom_call.1} parent=1 // pred_fallthru
      _
    // Predicated region
    $region30: #{tpu_custom_call.1} parent=1 // pred_check
      _
    $region31: #{tpu_custom_call.1} parent=1 // pred_check_branch
      %74 = sbr.rel (0) target = $region33
    $region32: #{tpu_custom_call.1} parent=1 // pred_region
      %s76 = ssub.s32 4096, 4096
      %77 = vsyncadd [#allocation10], %s76
      %s78 = sshll.u32 [#allocation11], 4
      %s79 = int_to_ptr.vmem [resolvable:$true] %s78
      %84 = dma.hbm_to_vmem [thread:$0]  %s7, 4096, %s79, [#allocation10], 256, 256, 16
    $region33: #{tpu_custom_call.1} parent=1 // pred_fallthru
      _
    // Predicated region
    $region34: #{tpu_custom_call.1} parent=1 // pred_check
      _
    $region35: #{tpu_custom_call.1} parent=1 // pred_check_branch
      %86 = sbr.rel (0) target = $region37
    $region36: #{tpu_custom_call.1} parent=1 // pred_region
      _
    $region37: #{tpu_custom_call.1} parent=1 // pred_fallthru
      _
    // Predicated region
    $region38: #{tpu_custom_call.1} parent=1 // pred_check
      _
    $region39: #{tpu_custom_call.1} parent=1 // pred_check_branch
      %88 = sbr.rel (0) target = $region41
    $region40: #{tpu_custom_call.1} parent=1 // pred_region
      _
    $region41: #{tpu_custom_call.1} parent=1 // pred_fallthru
      _
    // Predicated region
    $region42: #{tpu_custom_call.1} parent=1 // pred_check
      _
    $region43: #{tpu_custom_call.1} parent=1 // pred_check_branch
      %90 = sbr.rel (0) target = $region45
    $region44: #{tpu_custom_call.1} parent=1 // pred_region
      %91 = dma.done [#allocation4], 128
    $region45: #{tpu_custom_call.1} parent=1 // pred_fallthru
      _
    // Predicated region
    $region46: #{tpu_custom_call.1} parent=1 // pred_check
      _
    $region47: #{tpu_custom_call.1} parent=1 // pred_check_branch
      %93 = sbr.rel (0) target = $region49
    $region48: #{tpu_custom_call.1} parent=1 // pred_region
      %94 = dma.done [#allocation7], 1024
    $region49: #{tpu_custom_call.1} parent=1 // pred_fallthru
      _
    // Predicated region
    $region50: #{tpu_custom_call.1} parent=1 // pred_check
      _
    $region51: #{tpu_custom_call.1} parent=1 // pred_check_branch
      %96 = sbr.rel (0) target = $region53
    $region52: #{tpu_custom_call.1} parent=1 // pred_region
      %97 = dma.done [#allocation7], 1024
    $region53: #{tpu_custom_call.1} parent=1 // pred_fallthru
      _
    // Predicated region
    $region54: #{tpu_custom_call.1} parent=1 // pred_check
      _
    $region55: #{tpu_custom_call.1} parent=1 // pred_check_branch
      %99 = sbr.rel (0) target = $region57
    $region56: #{tpu_custom_call.1} parent=1 // pred_region
      %100 = dma.done [#allocation10], 2048
    $region57: #{tpu_custom_call.1} parent=1 // pred_fallthru
      _
    // Predicated region
    $region58: #{tpu_custom_call.1} parent=1 // pred_check
      _
    $region59: #{tpu_custom_call.1} parent=1 // pred_check_branch
      %102 = sbr.rel (0) target = $region61
    $region60: #{tpu_custom_call.1} parent=1 // pred_region
      %103 = dma.done [#allocation10], 4096
    $region61: #{tpu_custom_call.1} parent=1 // pred_fallthru
      _
    %v104 = vld [vmem:[#allocation3] sm:$0xff]
    %v105 = vld [vmem:[#allocation6] sm:$0xff]
    %v106 = vld [vmem:[#allocation6 + $0x8] sm:$0xff]
    %v107 = vld [vmem:[#allocation6 + $0x10] sm:$0xff]
    %v108 = vld [vmem:[#allocation6 + $0x18] sm:$0xff]
    %v109 = vld [vmem:[#allocation6 + $0x20] sm:$0xff]
    %v110 = vld [vmem:[#allocation6 + $0x28] sm:$0xff]
    %v111 = vld [vmem:[#allocation6 + $0x30] sm:$0xff]
    %v112 = vld [vmem:[#allocation6 + $0x38] sm:$0xff]
    %v113 = vld [vmem:[%s2] sm:$0x1]
    %v114 = vld [vmem:[#allocation8] sm:$0xff]
    %v115 = vld [vmem:[#allocation8 + $0x8] sm:$0xff]
    %v116 = vld [vmem:[#allocation8 + $0x10] sm:$0xff]
    %v117 = vld [vmem:[#allocation8 + $0x18] sm:$0xff]
    %v118 = vld [vmem:[#allocation8 + $0x20] sm:$0xff]
    %v119 = vld [vmem:[#allocation8 + $0x28] sm:$0xff]
    %v120 = vld [vmem:[#allocation8 + $0x30] sm:$0xff]
    %v121 = vld [vmem:[#allocation8 + $0x38] sm:$0xff]
    %v122 = vld [vmem:[%s4] sm:$0x1]
    %v124 = vlaneseq
    %v125 = vshrl.u32 %v124, 7
    %v126 = vsub.s32 0, %v125
    %v127 = vrot.slane %v113, %v126
    %vm129 = vcmask 523264
    %v131 = vsel %vm129, %v104, 0
    %133 = vmatprep.subr.mxu0 0.0
    %134 = vmatpush1.msra.mxu0 %v105
    %135 = vmatprep.subr.mxu0 0.0
    %136 = vmatpush1.msra.mxu0 %v106
    %137 = vmatprep.subr.mxu0 0.0
    %138 = vmatpush1.msra.mxu0 %v107
    %139 = vmatprep.subr.mxu0 0.0
    %140 = vmatpush1.msra.mxu0 %v108
    %141 = vmatprep.subr.mxu0 0.0
    %142 = vmatpush1.msra.mxu0 %v109
    %143 = vmatprep.subr.mxu0 0.0
    %144 = vmatpush1.msra.mxu0 %v110
    %145 = vmatprep.subr.mxu0 0.0
    %146 = vmatpush1.msra.mxu0 %v111
    %147 = vmatprep.subr.mxu0 0.0
    %148 = vmatpush1.msra.mxu0 %v112
    %149 = vmatprep.subr.mxu0 0.0
    %150 = vmatpush1.msra.mxu0 0.0
    %151 = vmatprep.subr.mxu0 0.0
    %152 = vmatpush1.msra.mxu0 0.0
    %153 = vmatprep.subr.mxu0 0.0
    %154 = vmatpush1.msra.mxu0 0.0
    %155 = vmatprep.subr.mxu0 0.0
    %156 = vmatpush1.msra.mxu0 0.0
    %157 = vmatprep.subr.mxu0 0.0
    %158 = vmatpush1.msra.mxu0 0.0
    %159 = vmatprep.subr.mxu0 0.0
    %160 = vmatpush1.msra.mxu0 0.0
    %161 = vmatprep.subr.mxu0 0.0
    %162 = vmatpush1.msra.mxu0 0.0
    %163 = vmatprep.subr.mxu0 0.0
    %164 = vmatpush1.msra.mxu0 0.0
    %165 = vmatprep.subr.mxu0 0.0
    %166 = vmatpush1.msra.mxu0 0.0
    %167 = vmatprep.subr.mxu0 0.0
    %168 = vmatpush1.msra.mxu0 0.0
    %169 = vmatprep.subr.mxu0 0.0
    %170 = vmatpush1.msra.mxu0 0.0
    %171 = vmatprep.subr.mxu0 0.0
    %172 = vmatpush1.msra.mxu0 0.0
    %173 = vmatprep.subr.mxu0 0.0
    %174 = vmatpush1.msra.mxu0 0.0
    %175 = vmatprep.subr.mxu0 0.0
    %176 = vmatpush1.msra.mxu0 0.0
    %177 = vmatprep.subr.mxu0 0.0
    %178 = vmatpush1.msra.mxu0 0.0
    %179 = vmatprep.subr.mxu0 0.0
    %180 = vmatpush1.msra.mxu0 0.0
    %181 = vmatprep.subr.mxu0 0.0
    %182 = vmatpush1.msra.mxu0 0.0
    %183 = vmatprep.subr.mxu0 0.0
    %184 = vmatpush1.msra.mxu0 0.0
    %185 = vmatprep.subr.mxu0 0.0
    %186 = vmatpush1.msra.mxu0 0.0
    %187 = vmatprep.subr.mxu0 0.0
    %188 = vmatpush1.msra.mxu0 0.0
    %189 = vmatprep.subr.mxu0 0.0
    %190 = vmatpush1.msra.mxu0 0.0
    %191 = vmatprep.subr.mxu0 0.0
    %192 = vmatpush1.msra.mxu0 0.0
    %193 = vmatprep.subr.mxu0 0.0
    %194 = vmatpush1.msra.mxu0 0.0
    %195 = vmatprep.subr.mxu0 0.0
    %196 = vmatpush1.msra.mxu0 0.0
    %197 = vmatprep.mubr.f32.mxu0 0.0
    %198 = vmatmul.mubr.f32.gmra.mrb[0].mxu0 %v131
    %v199 = vpop.f32.mrb[0].mxu0
    %v200 = vadd.f32 %v127, %v199
    %v201 = vpop.f32.mrb[0].mxu0
    %202 = vdwg.mxu0
    %v203 = vmax.f32 %v200, 0.0
    %v205 = vlaneseq
    %v206 = vshrl.u32 %v205, 7
    %v207 = vsub.s32 0, %v206
    %v208 = vrot.slane %v122, %v207
    %v211 = vsel %vm129, %v203, 0
    %213 = vmatprep.subr.mxu0 0.0
    %214 = vmatpush1.msra.mxu0 %v114
    %215 = vmatprep.subr.mxu0 0.0
    %216 = vmatpush1.msra.mxu0 %v115
    %217 = vmatprep.subr.mxu0 0.0
    %218 = vmatpush1.msra.mxu0 %v116
    %219 = vmatprep.subr.mxu0 0.0
    %220 = vmatpush1.msra.mxu0 %v117
    %221 = vmatprep.subr.mxu0 0.0
    %222 = vmatpush1.msra.mxu0 %v118
    %223 = vmatprep.subr.mxu0 0.0
    %224 = vmatpush1.msra.mxu0 %v119
    %225 = vmatprep.subr.mxu0 0.0
    %226 = vmatpush1.msra.mxu0 %v120
    %227 = vmatprep.subr.mxu0 0.0
    %228 = vmatpush1.msra.mxu0 %v121
    %229 = vmatprep.subr.mxu0 0.0
    %230 = vmatpush1.msra.mxu0 0.0
    %231 = vmatprep.subr.mxu0 0.0
    %232 = vmatpush1.msra.mxu0 0.0
    %233 = vmatprep.subr.mxu0 0.0
    %234 = vmatpush1.msra.mxu0 0.0
    %235 = vmatprep.subr.mxu0 0.0
    %236 = vmatpush1.msra.mxu0 0.0
    %237 = vmatprep.subr.mxu0 0.0
    %238 = vmatpush1.msra.mxu0 0.0
    %239 = vmatprep.subr.mxu0 0.0
    %240 = vmatpush1.msra.mxu0 0.0
    %241 = vmatprep.subr.mxu0 0.0
    %242 = vmatpush1.msra.mxu0 0.0
    %243 = vmatprep.subr.mxu0 0.0
    %244 = vmatpush1.msra.mxu0 0.0
    %245 = vmatprep.subr.mxu0 0.0
    %246 = vmatpush1.msra.mxu0 0.0
    %247 = vmatprep.subr.mxu0 0.0
    %248 = vmatpush1.msra.mxu0 0.0
    %249 = vmatprep.subr.mxu0 0.0
    %250 = vmatpush1.msra.mxu0 0.0
    %251 = vmatprep.subr.mxu0 0.0
    %252 = vmatpush1.msra.mxu0 0.0
    %253 = vmatprep.subr.mxu0 0.0
    %254 = vmatpush1.msra.mxu0 0.0
    %255 = vmatprep.subr.mxu0 0.0
    %256 = vmatpush1.msra.mxu0 0.0
    %257 = vmatprep.subr.mxu0 0.0
    %258 = vmatpush1.msra.mxu0 0.0
    %259 = vmatprep.subr.mxu0 0.0
    %260 = vmatpush1.msra.mxu0 0.0
    %261 = vmatprep.subr.mxu0 0.0
    %262 = vmatpush1.msra.mxu0 0.0
    %263 = vmatprep.subr.mxu0 0.0
    %264 = vmatpush1.msra.mxu0 0.0
    %265 = vmatprep.subr.mxu0 0.0
    %266 = vmatpush1.msra.mxu0 0.0
    %267 = vmatprep.subr.mxu0 0.0
    %268 = vmatpush1.msra.mxu0 0.0
    %269 = vmatprep.subr.mxu0 0.0
    %270 = vmatpush1.msra.mxu0 0.0
    %271 = vmatprep.subr.mxu0 0.0
    %272 = vmatpush1.msra.mxu0 0.0
    %273 = vmatprep.subr.mxu0 0.0
    %274 = vmatpush1.msra.mxu0 0.0
    %275 = vmatprep.subr.mxu0 0.0
    %276 = vmatpush1.msra.mxu0 0.0
    %277 = vmatprep.mubr.f32.mxu0 0.0
    %278 = vmatmul.mubr.f32.gmra.mrb[0].mxu0 %v211
    %v279 = vpop.f32.mrb[0].mxu0
    %v280 = vadd.f32 %v208, %v279
    %v281 = vpop.f32.mrb[0].mxu0
    %282 = vdwg.mxu0
    %v283 = vld [vmem:[#allocation9] sm:$0xff]
    %v284 = vld [vmem:[#allocation9 + $0x8] sm:$0xff]
    %v285 = vld [vmem:[#allocation9 + $0x10] sm:$0xff]
    %v286 = vld [vmem:[#allocation9 + $0x18] sm:$0xff]
    %v287 = vld [vmem:[#allocation9 + $0x20] sm:$0xff]
    %v288 = vld [vmem:[#allocation9 + $0x28] sm:$0xff]
    %v289 = vld [vmem:[#allocation9 + $0x30] sm:$0xff]
    %v290 = vld [vmem:[#allocation9 + $0x38] sm:$0xff]
    %v291 = vld [vmem:[#allocation9 + $0x40] sm:$0xff]
    %v292 = vld [vmem:[#allocation9 + $0x48] sm:$0xff]
    %v293 = vld [vmem:[#allocation9 + $0x50] sm:$0xff]
    %v294 = vld [vmem:[#allocation9 + $0x58] sm:$0xff]
    %v295 = vld [vmem:[#allocation9 + $0x60] sm:$0xff]
    %v296 = vld [vmem:[#allocation9 + $0x68] sm:$0xff]
    %v297 = vld [vmem:[#allocation9 + $0x70] sm:$0xff]
    %v298 = vld [vmem:[#allocation9 + $0x78] sm:$0xff]
    %v299 = vld [vmem:[%s6] sm:$0x1]
    %v300 = vld [vmem:[#allocation11] sm:$0xff]
    %v301 = vld [vmem:[#allocation11 + $0x8] sm:$0xff]
    %v302 = vld [vmem:[#allocation11 + $0x10] sm:$0xff]
    %v303 = vld [vmem:[#allocation11 + $0x18] sm:$0xff]
    %v304 = vld [vmem:[#allocation11 + $0x20] sm:$0xff]
    %v305 = vld [vmem:[#allocation11 + $0x28] sm:$0xff]
    %v306 = vld [vmem:[#allocation11 + $0x30] sm:$0xff]
    %v307 = vld [vmem:[#allocation11 + $0x38] sm:$0xff]
    %v308 = vld [vmem:[#allocation11 + $0x40] sm:$0xff]
    %v309 = vld [vmem:[#allocation11 + $0x48] sm:$0xff]
    %v310 = vld [vmem:[#allocation11 + $0x50] sm:$0xff]
    %v311 = vld [vmem:[#allocation11 + $0x58] sm:$0xff]
    %v312 = vld [vmem:[#allocation11 + $0x60] sm:$0xff]
    %v313 = vld [vmem:[#allocation11 + $0x68] sm:$0xff]
    %v314 = vld [vmem:[#allocation11 + $0x70] sm:$0xff]
    %v315 = vld [vmem:[#allocation11 + $0x78] sm:$0xff]
    %v316 = vld [vmem:[#allocation11 + $0x80] sm:$0xff]
    %v317 = vld [vmem:[#allocation11 + $0x88] sm:$0xff]
    %v318 = vld [vmem:[#allocation11 + $0x90] sm:$0xff]
    %v319 = vld [vmem:[#allocation11 + $0x98] sm:$0xff]
    %v320 = vld [vmem:[#allocation11 + $0xa0] sm:$0xff]
    %v321 = vld [vmem:[#allocation11 + $0xa8] sm:$0xff]
    %v322 = vld [vmem:[#allocation11 + $0xb0] sm:$0xff]
    %v323 = vld [vmem:[#allocation11 + $0xb8] sm:$0xff]
    %v324 = vld [vmem:[#allocation11 + $0xc0] sm:$0xff]
    %v325 = vld [vmem:[#allocation11 + $0xc8] sm:$0xff]
    %v326 = vld [vmem:[#allocation11 + $0xd0] sm:$0xff]
    %v327 = vld [vmem:[#allocation11 + $0xd8] sm:$0xff]
    %v328 = vld [vmem:[#allocation11 + $0xe0] sm:$0xff]
    %v329 = vld [vmem:[#allocation11 + $0xe8] sm:$0xff]
    %v330 = vld [vmem:[#allocation11 + $0xf0] sm:$0xff]
    %v331 = vld [vmem:[#allocation11 + $0xf8] sm:$0xff]
    %v332 = vld [vmem:[%s8] sm:$0x3]
    %v333 = vmax.f32 %v280, 0.0
    %v335 = vlaneseq
    %v336 = vshrl.u32 %v335, 7
    %v337 = vsub.s32 0, %v336
    %v338 = vrot.slane %v299, %v337
    %340 = vmatprep.subr.mxu0 0.0
    %341 = vmatpush1.msra.mxu0 %v283
    %342 = vmatprep.subr.mxu0 0.0
    %343 = vmatpush1.msra.mxu0 %v284
    %344 = vmatprep.subr.mxu0 0.0
    %345 = vmatpush1.msra.mxu0 %v285
    %346 = vmatprep.subr.mxu0 0.0
    %347 = vmatpush1.msra.mxu0 %v286
    %348 = vmatprep.subr.mxu0 0.0
    %349 = vmatpush1.msra.mxu0 %v287
    %350 = vmatprep.subr.mxu0 0.0
    %351 = vmatpush1.msra.mxu0 %v288
    %352 = vmatprep.subr.mxu0 0.0
    %353 = vmatpush1.msra.mxu0 %v289
    %354 = vmatprep.subr.mxu0 0.0
    %355 = vmatpush1.msra.mxu0 %v290
    %356 = vmatprep.subr.mxu0 0.0
    %357 = vmatpush1.msra.mxu0 %v291
    %358 = vmatprep.subr.mxu0 0.0
    %359 = vmatpush1.msra.mxu0 %v292
    %360 = vmatprep.subr.mxu0 0.0
    %361 = vmatpush1.msra.mxu0 %v293
    %362 = vmatprep.subr.mxu0 0.0
    %363 = vmatpush1.msra.mxu0 %v294
    %364 = vmatprep.subr.mxu0 0.0
    %365 = vmatpush1.msra.mxu0 %v295
    %366 = vmatprep.subr.mxu0 0.0
    %367 = vmatpush1.msra.mxu0 %v296
    %368 = vmatprep.subr.mxu0 0.0
    %369 = vmatpush1.msra.mxu0 %v297
    %370 = vmatprep.subr.mxu0 0.0
    %371 = vmatpush1.msra.mxu0 %v298
    %372 = vmatprep.subr.mxu0 0.0
    %373 = vmatpush1.msra.mxu0 0.0
    %374 = vmatprep.subr.mxu0 0.0
    %375 = vmatpush1.msra.mxu0 0.0
    %376 = vmatprep.subr.mxu0 0.0
    %377 = vmatpush1.msra.mxu0 0.0
    %378 = vmatprep.subr.mxu0 0.0
    %379 = vmatpush1.msra.mxu0 0.0
    %380 = vmatprep.subr.mxu0 0.0
    %381 = vmatpush1.msra.mxu0 0.0
    %382 = vmatprep.subr.mxu0 0.0
    %383 = vmatpush1.msra.mxu0 0.0
    %384 = vmatprep.subr.mxu0 0.0
    %385 = vmatpush1.msra.mxu0 0.0
    %386 = vmatprep.subr.mxu0 0.0
    %387 = vmatpush1.msra.mxu0 0.0
    %388 = vmatprep.subr.mxu0 0.0
    %389 = vmatpush1.msra.mxu0 0.0
    %390 = vmatprep.subr.mxu0 0.0
    %391 = vmatpush1.msra.mxu0 0.0
    %392 = vmatprep.subr.mxu0 0.0
    %393 = vmatpush1.msra.mxu0 0.0
    %394 = vmatprep.subr.mxu0 0.0
    %395 = vmatpush1.msra.mxu0 0.0
    %396 = vmatprep.subr.mxu0 0.0
    %397 = vmatpush1.msra.mxu0 0.0
    %398 = vmatprep.subr.mxu0 0.0
    %399 = vmatpush1.msra.mxu0 0.0
    %400 = vmatprep.subr.mxu0 0.0
    %401 = vmatpush1.msra.mxu0 0.0
    %402 = vmatprep.subr.mxu0 0.0
    %403 = vmatpush1.msra.mxu0 0.0
    %404 = vmatprep.mubr.f32.mxu0 0.0
    %405 = vmatmul.mubr.f32.gmra.mrb[0].mxu0 %v333
    %v406 = vpop.f32.mrb[0].mxu0
    %v407 = vadd.f32 %v338, %v406
    %v408 = vpop.f32.mrb[0].mxu0
    %409 = vdwg.mxu0
    %v410 = vmax.f32 %v407, 0.0
    %v412 = vlaneseq
    %v413 = vshrl.u32 %v412, 7
    %v414 = vsub.s32 0, %v413
    %v415 = vrot.slane %v332, %v414
    %v416 = vlaneseq
    %v417 = vshrl.u32 %v416, 7
    %v418 = vsub.s32 1, %v417
    %v419 = vrot.slane %v332, %v418
    %422 = vmatprep.subr.mxu0 %v301
    %423 = vmatpush1.msra.mxu0 %v300
    %424 = vmatprep.subr.mxu0 %v303
    %425 = vmatpush1.msra.mxu0 %v302
    %426 = vmatprep.subr.mxu0 %v305
    %427 = vmatpush1.msra.mxu0 %v304
    %428 = vmatprep.subr.mxu0 %v307
    %429 = vmatpush1.msra.mxu0 %v306
    %430 = vmatprep.subr.mxu0 %v309
    %431 = vmatpush1.msra.mxu0 %v308
    %432 = vmatprep.subr.mxu0 %v311
    %433 = vmatpush1.msra.mxu0 %v310
    %434 = vmatprep.subr.mxu0 %v313
    %435 = vmatpush1.msra.mxu0 %v312
    %436 = vmatprep.subr.mxu0 %v315
    %437 = vmatpush1.msra.mxu0 %v314
    %438 = vmatprep.subr.mxu0 %v317
    %439 = vmatpush1.msra.mxu0 %v316
    %440 = vmatprep.subr.mxu0 %v319
    %441 = vmatpush1.msra.mxu0 %v318
    %442 = vmatprep.subr.mxu0 %v321
    %443 = vmatpush1.msra.mxu0 %v320
    %444 = vmatprep.subr.mxu0 %v323
    %445 = vmatpush1.msra.mxu0 %v322
    %446 = vmatprep.subr.mxu0 %v325
    %447 = vmatpush1.msra.mxu0 %v324
    %448 = vmatprep.subr.mxu0 %v327
    %449 = vmatpush1.msra.mxu0 %v326
    %450 = vmatprep.subr.mxu0 %v329
    %451 = vmatpush1.msra.mxu0 %v328
    %452 = vmatprep.subr.mxu0 %v331
    %453 = vmatpush1.msra.mxu0 %v330
    %454 = vmatprep.subr.mxu0 0.0
    %455 = vmatpush1.msra.mxu0 0.0
    %456 = vmatprep.subr.mxu0 0.0
    %457 = vmatpush1.msra.mxu0 0.0
    %458 = vmatprep.subr.mxu0 0.0
    %459 = vmatpush1.msra.mxu0 0.0
    %460 = vmatprep.subr.mxu0 0.0
    %461 = vmatpush1.msra.mxu0 0.0
    %462 = vmatprep.subr.mxu0 0.0
    %463 = vmatpush1.msra.mxu0 0.0
    %464 = vmatprep.subr.mxu0 0.0
    %465 = vmatpush1.msra.mxu0 0.0
    %466 = vmatprep.subr.mxu0 0.0
    %467 = vmatpush1.msra.mxu0 0.0
    %468 = vmatprep.subr.mxu0 0.0
    %469 = vmatpush1.msra.mxu0 0.0
    %470 = vmatprep.subr.mxu0 0.0
    %471 = vmatpush1.msra.mxu0 0.0
    %472 = vmatprep.subr.mxu0 0.0
    %473 = vmatpush1.msra.mxu0 0.0
    %474 = vmatprep.subr.mxu0 0.0
    %475 = vmatpush1.msra.mxu0 0.0
    %476 = vmatprep.subr.mxu0 0.0
    %477 = vmatpush1.msra.mxu0 0.0
    %478 = vmatprep.subr.mxu0 0.0
    %479 = vmatpush1.msra.mxu0 0.0
    %480 = vmatprep.subr.mxu0 0.0
    %481 = vmatpush1.msra.mxu0 0.0
    %482 = vmatprep.subr.mxu0 0.0
    %483 = vmatpush1.msra.mxu0 0.0
    %484 = vmatprep.subr.mxu0 0.0
    %485 = vmatpush1.msra.mxu0 0.0
    %486 = vmatprep.mubr.f32.mxu0 0.0
    %487 = vmatmul.mubr.f32.gmra.mrb[0].mxu0 %v410
    %v488 = vpop.f32.mrb[0].mxu0
    %v489 = vadd.f32 %v415, %v488
    %v490 = vpop.f32.mrb[0].mxu0
    %v491 = vadd.f32 %v419, %v490
    %492 = vdwg.mxu0
    %v493 = vmul.f32 %v489, %v489
    %v494 = vmul.f32 %v491, %v491
    %v495 = vadd.f32 %v493, %v494
    %496 = vadd.xlane.f32.xlu0 %v495
    %v497 = vpop.xlane.xlu0 %496
    %v498 = vadd.f32 %v497, 1e-12
    %v499 = vrsqrt.pop %v498
    %v500 = vmul.f32 %v489, %v499
    %v501 = vmul.f32 %v491, %v499
    %v502 = vld [vmem:[#allocation2] sm:$0x1]
    %v504 = vlaneseq
    %v505 = vshrl.u32 %v504, 7
    %v506 = vsub.s32 0, %v505
    %v507 = vrot.slane %v502, %v506
    %508 = vset.pattern.permute.xlu0 0
    %509 = vperm.xlu0 %508, %v507
    %v510 = vpop.permute.xlu0 %509
    %v512 = vmul.f32 %v500, %v510
    %v513 = vmul.f32 %v501, %v510
    %514 = vst [vmem:[#allocation12] sm:$0xff] %v512
    %515 = vst [vmem:[#allocation12 + $0x8] sm:$0xff] %v513
    // Predicated region
    $region62: #{tpu_custom_call.1} parent=1 // pred_check
      _
    $region63: #{tpu_custom_call.1} parent=1 // pred_check_branch
      %517 = sbr.rel (0) target = $region65
    $region64: #{tpu_custom_call.1} parent=1 // pred_region
      %s519 = ssub.s32 256, 256
      %520 = vsyncadd [#allocation5], %s519
      %s522 = sshll.u32 [#allocation12], 4
      %s523 = int_to_ptr.vmem [resolvable:$true] %s522
      %525 = dma.vmem_to_hbm [thread:$0]  %s523, 256, %s10, [#allocation5]
    $region65: #{tpu_custom_call.1} parent=1 // pred_fallthru
      _
    // Predicated region
    $region66: #{tpu_custom_call.1} parent=1 // pred_check
      _
    $region67: #{tpu_custom_call.1} parent=1 // pred_check_branch
      %527 = sbr.rel (0) target = $region69
    $region68: #{tpu_custom_call.1} parent=1 // pred_region
      %528 = dma.done [#allocation5], 256
    $region69: #{tpu_custom_call.1} parent=1 // pred_fallthru
      _
    %529 = vsyncpa [#allocation4], 1
    %530 = vsyncpa [#allocation7], 1
    %531 = vsyncpa [#allocation10], 1
    %532 = vsyncpa [#allocation5], 1

</llo_original>
